<compile_context>
chip_gen: v7x
topology: tpu7x:2x2x1
jax: 0.10.0
libtpu: 0.0.40
codegen_flags: <defaults>
</compile_context>

<pallas_src>
import math

import jax
import jax.numpy as jnp
import numpy as np
from jax.experimental import pallas as pl
from jax.experimental.pallas import tpu as pltpu

D_MODEL = 3
N_HEADS = 3
HEAD_DIM = D_MODEL // N_HEADS        # == 1 -> softmax scale 1/sqrt(1) == 1 (omitted)
N_LAYERS = 2
HIDDEN = 64
N_CLASSES = 6
LN_EPS = 1e-5
NEG_BIG = -1e30                      # additive mask value for padded key lanes

# ---------------------------------------------------------------------------
# Parameter slab: one (SLAB_ROWS, 128) f32 array.  Every row block starts at a
# multiple of 8 sublanes; "column" params (biases, LN gamma/beta) live in
# lane 0; Wo is stored transposed so head h's output-projection column is a row.
# ---------------------------------------------------------------------------
SLAB_LANES = 128

R_WQ = 0        # (3, 3)   Wq
R_BQ = 8        # (3, 1)   bq
R_WKV = 16      # (6, 3)   [Wk; Wv]
R_BKV = 24      # (6, 1)   [bk; bv]
R_WOT = 32      # (3, 3)   Wo^T  (row h == Wo[:, h])
R_BO = 40       # (3, 1)   out_proj bias
R_G1 = 48       # (3, 1)   norm1 weight
R_BE1 = 56      # (3, 1)   norm1 bias
R_G2 = 64       # (3, 1)   norm2 weight
R_BE2 = 72      # (3, 1)   norm2 bias
R_W1 = 80       # (64, 3)  linear1 weight
R_B1 = 144      # (64, 1)  linear1 bias
R_W2 = 208      # (3, 64)  linear2 weight
R_B2 = 216      # (3, 1)   linear2 bias
LAYER_ROWS = 224

R_FCW = N_LAYERS * LAYER_ROWS        # (6, 3) fc weight
R_FCB = R_FCW + 8                    # (6, 1) fc bias
SLAB_ROWS = R_FCB + 8                # 464


def _layer_norm_feat(x, gamma_col, beta_col):
    """LayerNorm over the feature (sublane) axis of an (E, T) activation."""
    mu = jnp.mean(x, axis=0, keepdims=True)
    var = jnp.mean((x - mu) ** 2, axis=0, keepdims=True)
    return (x - mu) * jax.lax.rsqrt(var + LN_EPS) * gamma_col + beta_col


def make_layer_kernel(layer, with_head, use_bf16):
    """One post-norm encoder layer (optionally fused with the fc head)."""
    base = layer * LAYER_ROWS

    def kernel(h_ref, slab_ref, mask_ref, out_ref, kv_sc):
        # h_ref   : (3, S_pad) full layer input (features on sublanes, seq on lanes)
        # slab_ref: (SLAB_ROWS, 128) packed parameters
        # mask_ref: (1, S_pad) additive key mask (0 valid / -1e30 pad)
        # out_ref : (3, tq) layer output tile, or (6, tq) logits tile if with_head
        # kv_sc   : (6, S_pad) scratch holding this layer's K (rows 0..2) / V (rows 3..5)
        s_pad = h_ref.shape[1]
        tq = out_ref.shape[1]
        q0 = pl.multiple_of(pl.program_id(0) * tq, tq)

        h_full = h_ref[...]                                   # (3, S_pad)
        h_tile = h_ref[:, pl.ds(q0, tq)]                      # (3, tq)
        h_tile_t = h_tile.T                                   # (tq, 3) -- one small transpose / step

        # K/V for the whole (padded) sequence; head_dim == 1 -> one row per head.
        w_kv = slab_ref[base + R_WKV: base + R_WKV + 2 * D_MODEL, 0:D_MODEL]   # (6, 3)
        b_kv = slab_ref[base + R_BKV: base + R_BKV + 2 * D_MODEL, 0:1]         # (6, 1)
        kv_sc[...] = jnp.dot(w_kv, h_full, preferred_element_type=jnp.float32) + b_kv

        mask_add = mask_ref[...]                              # (1, S_pad)

        def head_body(hd, attn_t):
            # q for head hd as a (tq, 1) column via a 3-lane row-dot (no per-head transpose).
            wq_row = slab_ref[pl.ds(base + R_WQ + hd, 1), 0:D_MODEL]           # (1, 3)
            bq_el = slab_ref[pl.ds(base + R_BQ + hd, 1), 0:1]                  # (1, 1)
            q_col = jnp.sum(h_tile_t * wq_row, axis=1, keepdims=True) + bq_el  # (tq, 1)

            k_row = kv_sc[pl.ds(hd, 1), :]                                     # (1, S_pad)
            v_row = kv_sc[pl.ds(N_HEADS + hd, 1), :]                           # (1, S_pad)

            # Rank-1 closed-form, exact row max over *valid* keys (review item 8).
            kmax = jnp.max(k_row + mask_add, axis=1, keepdims=True)            # (1, 1)
            kmin = jnp.min(k_row - mask_add, axis=1, keepdims=True)            # (1, 1)
            m = q_col * jnp.where(q_col >= 0.0, kmax, kmin)                    # (tq, 1)

            # Scores as a VPU outer product; padded keys pushed to -1e30 -> exp == 0.
            s = q_col * k_row - m + mask_add                                   # (tq, S_pad)
            if use_bf16:
                p = jnp.exp(s.astype(jnp.bfloat16))                            # bf16 exp/p (v6e/v7x)
                pv = p * v_row.astype(jnp.bfloat16)
            else:
                p = jnp.exp(s)                                                 # f32 (v5e)
                pv = p * v_row
            l = jnp.sum(p, axis=1, keepdims=True, dtype=jnp.float32)           # f32 accumulate
            o = jnp.sum(pv, axis=1, keepdims=True, dtype=jnp.float32)          # (tq, 1)
            o = o * pl.reciprocal(l, approx=True)

            # Fold the output projection: attn_t += o (outer) Wo[:, hd].
            wo_row = slab_ref[pl.ds(base + R_WOT + hd, 1), 0:D_MODEL]          # (1, 3)
            return attn_t + o * wo_row                                         # (tq, 3)

        # fori_loop (not unrolled) so only one head's (tq, S_pad) score buffer is
        # live at a time (review item 9); loop overhead is negligible at 3 trips.
        attn_t = jax.lax.fori_loop(0, N_HEADS, head_body,
                                   jnp.zeros((tq, D_MODEL), jnp.float32))

        bo = slab_ref[base + R_BO: base + R_BO + D_MODEL, 0:1]                 # (3, 1)
        attn = attn_t.T + bo                                                   # (3, tq)

        g1 = slab_ref[base + R_G1: base + R_G1 + D_MODEL, 0:1]
        be1 = slab_ref[base + R_BE1: base + R_BE1 + D_MODEL, 0:1]
        h1 = _layer_norm_feat(h_tile + attn, g1, be1)                          # (3, tq)

        w1 = slab_ref[base + R_W1: base + R_W1 + HIDDEN, 0:D_MODEL]            # (64, 3)
        b1 = slab_ref[base + R_B1: base + R_B1 + HIDDEN, 0:1]                  # (64, 1)
        w2 = slab_ref[base + R_W2: base + R_W2 + D_MODEL, 0:HIDDEN]            # (3, 64)
        b2 = slab_ref[base + R_B2: base + R_B2 + D_MODEL, 0:1]                 # (3, 1)
        ff = jnp.maximum(jnp.dot(w1, h1, preferred_element_type=jnp.float32) + b1, 0.0)
        ff = jnp.dot(w2, ff, preferred_element_type=jnp.float32) + b2          # (3, tq)

        g2 = slab_ref[base + R_G2: base + R_G2 + D_MODEL, 0:1]
        be2 = slab_ref[base + R_BE2: base + R_BE2 + D_MODEL, 0:1]
        h2 = _layer_norm_feat(h1 + ff, g2, be2)                                # (3, tq)

        if with_head:
            fc_w = slab_ref[R_FCW:R_FCW + N_CLASSES, 0:D_MODEL]                # (6, 3)
            fc_b = slab_ref[R_FCB:R_FCB + N_CLASSES, 0:1]                      # (6, 1)
            logits = jnp.dot(fc_w, h2, preferred_element_type=jnp.float32) + fc_b
            out_ref[...] = logits.astype(out_ref.dtype)
        else:
            out_ref[...] = h2.astype(out_ref.dtype)

    return kernel


def _run_layer(h_pad, slab, mask_add, *, layer, with_head, use_bf16, tq,
               vmem_limit_bytes=None):
    s_pad = h_pad.shape[1]
    num_tiles = s_pad // tq
    out_rows = N_CLASSES if with_head else D_MODEL

    grid_spec = pltpu.PrefetchScalarGridSpec(
        num_scalar_prefetch=0,
        grid=(num_tiles,),
        in_specs=[
            pl.BlockSpec((D_MODEL, s_pad), lambda i: (0, 0)),          # full h (K/V source)
            pl.BlockSpec((SLAB_ROWS, SLAB_LANES), lambda i: (0, 0)),   # packed params
            pl.BlockSpec((1, s_pad), lambda i: (0, 0)),                # additive key mask
        ],
        out_specs=pl.BlockSpec((out_rows, tq), lambda i: (0, i)),
        scratch_shapes=[pltpu.VMEM((2 * N_HEADS, s_pad), jnp.float32)],
    )
    cp_kwargs = dict(dimension_semantics=("parallel",))
    if vmem_limit_bytes is not None:
        cp_kwargs["vmem_limit_bytes"] = vmem_limit_bytes

    return pl.pallas_call(
        make_layer_kernel(layer, with_head, use_bf16),
        out_shape=jax.ShapeDtypeStruct((out_rows, s_pad), jnp.float32),
        grid_spec=grid_spec,
        compiler_params=pltpu.CompilerParams(**cp_kwargs),
    )(h_pad, slab, mask_add)


def _device_kind():
    try:
        return jax.devices()[0].device_kind.lower()
    except Exception:
        return ""


def emotion_classifier(x, slab, *, vmem_limit_bytes=None):
    """x: (S, 3) float32, packed slab -> (S, 6) logits."""
    S = x.shape[0]
    kind = _device_kind()
    # bf16 scores only where the VPU/EUP have a bf16 path (v6e / v7x); f32 on v5e.
    use_bf16 = ("v6" in kind) or ("v7" in kind) or ("7x" in kind)
    # Per-generation query-tile cap: v7x has 64 MiB VMEM -> smaller score tiles.
    tq_cap = 256 if (("v7" in kind) or ("7x" in kind)) else 512

    s128 = ((S + 127) // 128) * 128
    if s128 <= tq_cap:
        tq, s_pad = s128, s128
    else:
        tq = tq_cap
        s_pad = ((S + tq - 1) // tq) * tq

    x_t = jnp.transpose(x).astype(jnp.float32)                 # (3, S) lane-dense in S
    h = jnp.pad(x_t, ((0, 0), (0, s_pad - S)))                 # zero-pad to lane multiple
    mask_add = jnp.where(jnp.arange(s_pad) < S, 0.0, NEG_BIG)  # padded keys -> exp == 0
    mask_add = mask_add.astype(jnp.float32).reshape(1, s_pad)

    for layer in range(N_LAYERS):
        h = _run_layer(h, slab, mask_add, layer=layer,
                       with_head=(layer == N_LAYERS - 1),
                       use_bf16=use_bf16, tq=tq,
                       vmem_limit_bytes=vmem_limit_bytes)

    return jnp.transpose(h[:, :S])                             # (S, 6)


# ---------------------------------------------------------------------------
# Parameters (native PyTorch shapes), packing, and numpy reference.
# ---------------------------------------------------------------------------
def init_params(key):
    layers = []
    for _ in range(N_LAYERS):
        key, *ks = jax.random.split(key, 9)
        layers.append(dict(
            in_proj_weight=jax.random.normal(ks[0], (3 * D_MODEL, D_MODEL), jnp.float32) * 0.2,
            in_proj_bias=jax.random.normal(ks[1], (3 * D_MODEL,), jnp.float32) * 0.02,
            out_proj_weight=jax.random.normal(ks[2], (D_MODEL, D_MODEL), jnp.float32) * 0.2,
            out_proj_bias=jax.random.normal(ks[3], (D_MODEL,), jnp.float32) * 0.02,
            linear1_weight=jax.random.normal(ks[4], (HIDDEN, D_MODEL), jnp.float32) * 0.2,
            linear1_bias=jax.random.normal(ks[5], (HIDDEN,), jnp.float32) * 0.02,
            linear2_weight=jax.random.normal(ks[6], (D_MODEL, HIDDEN), jnp.float32) * 0.1,
            linear2_bias=jax.random.normal(ks[7], (D_MODEL,), jnp.float32) * 0.02,
            norm1_weight=jnp.ones((D_MODEL,), jnp.float32),
            norm1_bias=jnp.zeros((D_MODEL,), jnp.float32),
            norm2_weight=jnp.ones((D_MODEL,), jnp.float32),
            norm2_bias=jnp.zeros((D_MODEL,), jnp.float32),
        ))
    key, k1, k2 = jax.random.split(key, 3)
    fc_w = jax.random.normal(k1, (N_CLASSES, D_MODEL), jnp.float32) * 0.2
    fc_b = jax.random.normal(k2, (N_CLASSES,), jnp.float32) * 0.02
    return layers, fc_w, fc_b


def pack_params(layers, fc_w, fc_b):
    """Pack all module parameters into one 8-row-aligned (SLAB_ROWS, 128) slab."""
    slab = np.zeros((SLAB_ROWS, SLAB_LANES), np.float32)

    def put(row, block):
        block = np.asarray(block, np.float32)
        if block.ndim == 1:
            block = block[:, None]
        slab[row:row + block.shape[0], 0:block.shape[1]] = block

    for l, p in enumerate(layers):
        b = l * LAYER_ROWS
        w_in = np.asarray(p["in_proj_weight"], np.float32)      # (9, 3)
        b_in = np.asarray(p["in_proj_bias"], np.float32)        # (9,)
        put(b + R_WQ, w_in[0:D_MODEL])                          # Wq (3, 3)
        put(b + R_BQ, b_in[0:D_MODEL])                          # bq (3, 1)
        put(b + R_WKV, w_in[D_MODEL:3 * D_MODEL])               # [Wk; Wv] (6, 3)
        put(b + R_BKV, b_in[D_MODEL:3 * D_MODEL])               # (6, 1)
        put(b + R_WOT, np.asarray(p["out_proj_weight"], np.float32).T)   # Wo^T (3, 3)
        put(b + R_BO, p["out_proj_bias"])
        put(b + R_G1, p["norm1_weight"])
        put(b + R_BE1, p["norm1_bias"])
        put(b + R_G2, p["norm2_weight"])
        put(b + R_BE2, p["norm2_bias"])
        put(b + R_W1, p["linear1_weight"])
        put(b + R_B1, p["linear1_bias"])
        put(b + R_W2, p["linear2_weight"])
        put(b + R_B2, p["linear2_bias"])
    put(R_FCW, fc_w)
    put(R_FCB, fc_b)
    return jnp.asarray(slab)


def _np_layer_norm(x, g, b):
    mu = x.mean(axis=-1, keepdims=True)
    var = ((x - mu) ** 2).mean(axis=-1, keepdims=True)
    return (x - mu) / np.sqrt(var + LN_EPS) * g + b


def reference_forward(x, layers, fc_w, fc_b):
    """Pure numpy (float64) re-implementation of the PyTorch forward pass."""
    h = np.asarray(x, np.float64)
    for p in layers:
        P = {k: np.asarray(v, np.float64) for k, v in p.items()}
        qkv = h @ P["in_proj_weight"].T + P["in_proj_bias"]
        q, k, v = qkv[:, :D_MODEL], qkv[:, D_MODEL:2 * D_MODEL], qkv[:, 2 * D_MODEL:]
        heads = []
        for hd in range(N_HEADS):
            sl = slice(hd * HEAD_DIM, (hd + 1) * HEAD_DIM)
            s = (q[:, sl] / math.sqrt(HEAD_DIM)) @ k[:, sl].T
            s = s - s.max(axis=-1, keepdims=True)
            e = np.exp(s)
            heads.append((e / e.sum(axis=-1, keepdims=True)) @ v[:, sl])
        attn = np.concatenate(heads, axis=-1) @ P["out_proj_weight"].T + P["out_proj_bias"]
        h = _np_layer_norm(h + attn, P["norm1_weight"], P["norm1_bias"])
        ff = np.maximum(h @ P["linear1_weight"].T + P["linear1_bias"], 0.0)
        ff = ff @ P["linear2_weight"].T + P["linear2_bias"]
        h = _np_layer_norm(h + ff, P["norm2_weight"], P["norm2_bias"])
    return h @ np.asarray(fc_w, np.float64).T + np.asarray(fc_b, np.float64)


if __name__ == "__main__":
    key = jax.random.PRNGKey(0)
    key_x, key_p = jax.random.split(key)
    # batch of 8 VAD-style samples, each with input_dim=3 features
    x = jax.random.normal(key_x, (8, D_MODEL), jnp.float32)
    layers, fc_w, fc_b = init_params(key_p)
    slab = pack_params(layers, fc_w, fc_b)

    out = emotion_classifier(x, slab)
    out = jax.block_until_ready(out)
    assert out.shape == (8, N_CLASSES), out.shape

    ref = reference_forward(x, layers, fc_w, fc_b)
    np.testing.assert_allclose(np.asarray(out, np.float64), ref, rtol=2e-2, atol=2e-2)
    print("KERNEL_OK")
</pallas_src>

<mosaic_0001>
module attributes {stable_mosaic.version = 11 : i64} {
  func.func @kernel(%arg0: i32, %arg1: memref<3x128xf32, #tpu.memory_space<vmem>>, %arg2: memref<464x128xf32, #tpu.memory_space<vmem>>, %arg3: memref<1x128xf32, #tpu.memory_space<vmem>>, %arg4: memref<3x128xf32, #tpu.memory_space<vmem>>, %arg5: memref<6x128xf32, #tpu.memory_space<vmem>>) attributes {dimension_semantics = [#tpu.dimension_semantics<parallel>], iteration_bounds = array<i64: 1>, scalar_prefetch = 0 : i64, scratch_operands = 1 : i64, tpu.core_type = #tpu.core_type<tc>, window_params = [{pipeline_mode = #tpu.pipeline_mode<synchronous>, transform_indices = @transform_0, window_bounds = array<i64: 3, 128>}, {pipeline_mode = #tpu.pipeline_mode<synchronous>, transform_indices = @transform_1, window_bounds = array<i64: 464, 128>}, {pipeline_mode = #tpu.pipeline_mode<synchronous>, transform_indices = @transform_2, window_bounds = array<i64: 1, 128>}, {transform_indices = @transform_3, window_bounds = array<i64: 3, 128>}]} {
    %c128_i32 = arith.constant 128 : i32
    %0 = arith.muli %arg0, %c128_i32 : i32
    %1 = tpu.assume_multiple %0, 128 : i32
    %c0 = arith.constant 0 : index
    %c0_0 = arith.constant 0 : index
    %2 = vector.load %arg1[%c0, %c0_0] : memref<3x128xf32, #tpu.memory_space<vmem>>, vector<3x128xf32>
    %c0_1 = arith.constant 0 : index
    %3 = arith.index_cast %1 : i32 to index
    %4 = vector.load %arg1[%c0_1, %3] : memref<3x128xf32, #tpu.memory_space<vmem>>, vector<3x128xf32>
    %5 = tpu.transpose %4, [1, 0] : vector<3x128xf32> -> vector<128x3xf32>
    %c16 = arith.constant 16 : index
    %c0_2 = arith.constant 0 : index
    %6 = vector.load %arg2[%c16, %c0_2] : memref<464x128xf32, #tpu.memory_space<vmem>>, vector<6x3xf32>
    %c24 = arith.constant 24 : index
    %c0_3 = arith.constant 0 : index
    %7 = vector.load %arg2[%c24, %c0_3] : memref<464x128xf32, #tpu.memory_space<vmem>>, vector<6x1xf32>
    %cst = arith.constant dense<0.000000e+00> : vector<6x128xf32>
    %8 = tpu.matmul %6, %2, %cst {dimension_numbers = #tpu.dot_dimension_numbers<[1], [0], [0], [1], [0, 0, 1, 1], [], []>} : vector<6x3xf32>, vector<3x128xf32>, vector<6x128xf32> -> vector<6x128xf32>
    %9 = vector.broadcast %7 : vector<6x1xf32> to vector<6x128xf32>
    %10 = arith.addf %8, %9 : vector<6x128xf32>
    %c0_4 = arith.constant 0 : index
    %c0_5 = arith.constant 0 : index
    %11 = vector.load %arg5[%c0_4, %c0_5] : memref<6x128xf32, #tpu.memory_space<vmem>>, vector<6x128xf32>
    tpu.vector_store %arg5[%c0_4, %c0_5], %10 {strides = array<i32>} : memref<6x128xf32, #tpu.memory_space<vmem>>, vector<6x128xf32>,
    %c0_6 = arith.constant 0 : index
    %c0_7 = arith.constant 0 : index
    %12 = vector.load %arg3[%c0_6, %c0_7] : memref<1x128xf32, #tpu.memory_space<vmem>>, vector<1x128xf32>
    %cst_8 = arith.constant 0.000000e+00 : f32
    %13 = vector.broadcast %cst_8 : f32 to vector<128x3xf32>
    %c0_i32 = arith.constant 0 : i32
    %c3_i32 = arith.constant 3 : i32
    %14 = arith.addi %c0_i32, %c3_i32 : i32
    %c1_i32 = arith.constant 1 : i32
    %15 = scf.for %arg6 = %c0_i32 to %14 step %c1_i32 iter_args(%arg7 = %13) -> (vector<128x3xf32>)  : i32 {
      %c0_i32_34 = arith.constant 0 : i32
      %83 = arith.addi %c0_i32_34, %arg6 : i32
      %84 = arith.index_cast %83 : i32 to index
      %c0_35 = arith.constant 0 : index
      %85 = vector.load %arg2[%84, %c0_35] : memref<464x128xf32, #tpu.memory_space<vmem>>, vector<1x3xf32>
      %c8_i32 = arith.constant 8 : i32
      %86 = arith.addi %c8_i32, %arg6 : i32
      %87 = arith.index_cast %86 : i32 to index
      %c0_36 = arith.constant 0 : index
      %88 = vector.load %arg2[%87, %c0_36] : memref<464x128xf32, #tpu.memory_space<vmem>>, vector<1x1xf32>
      %89 = vector.broadcast %85 : vector<1x3xf32> to vector<128x3xf32>
      %90 = arith.mulf %5, %89 : vector<128x3xf32>
      %cst_37 = arith.constant dense<0.000000e+00> : vector<128xf32>
      %91 = vector.multi_reduction <add>, %90, %cst_37 [1] : vector<128x3xf32> to vector<128xf32>
      %92 = vector.shape_cast %91 : vector<128xf32> to vector<128x1xf32>
      %93 = vector.broadcast %88 : vector<1x1xf32> to vector<128x1xf32>
      %94 = arith.addf %92, %93 : vector<128x1xf32>
      %95 = arith.index_cast %arg6 : i32 to index
      %c0_38 = arith.constant 0 : index
      %96 = vector.load %arg5[%95, %c0_38] : memref<6x128xf32, #tpu.memory_space<vmem>>, vector<1x128xf32>
      %c3_i32_39 = arith.constant 3 : i32
      %97 = arith.addi %c3_i32_39, %arg6 : i32
      %98 = arith.index_cast %97 : i32 to index
      %c0_40 = arith.constant 0 : index
      %99 = vector.load %arg5[%98, %c0_40] : memref<6x128xf32, #tpu.memory_space<vmem>>, vector<1x128xf32>
      %100 = arith.addf %96, %12 : vector<1x128xf32>
      %cst_41 = arith.constant dense<0xFF800000> : vector<1xf32>
      %101 = vector.multi_reduction <maximumf>, %100, %cst_41 [1] : vector<1x128xf32> to vector<1xf32>
      %102 = vector.shape_cast %101 : vector<1xf32> to vector<1x1xf32>
      %103 = arith.subf %96, %12 : vector<1x128xf32>
      %cst_42 = arith.constant dense<0x7F800000> : vector<1xf32>
      %104 = vector.multi_reduction <minimumf>, %103, %cst_42 [1] : vector<1x128xf32> to vector<1xf32>
      %105 = vector.shape_cast %104 : vector<1xf32> to vector<1x1xf32>
      %cst_43 = arith.constant 0.000000e+00 : f32
      %106 = vector.broadcast %cst_43 : f32 to vector<128x1xf32>
      %107 = arith.cmpf oge, %94, %106 : vector<128x1xf32>
      %108 = vector.shape_cast %102 : vector<1x1xf32> to vector<1x1xf32>
      %109 = vector.broadcast %108 : vector<1x1xf32> to vector<128x1xf32>
      %110 = vector.shape_cast %105 : vector<1x1xf32> to vector<1x1xf32>
      %111 = vector.broadcast %110 : vector<1x1xf32> to vector<128x1xf32>
      %112 = arith.select %107, %109, %111 : vector<128x1xi1>, vector<128x1xf32>
      %113 = arith.mulf %94, %112 : vector<128x1xf32>
      %114 = vector.broadcast %94 : vector<128x1xf32> to vector<128x128xf32>
      %115 = vector.broadcast %96 : vector<1x128xf32> to vector<128x128xf32>
      %116 = arith.mulf %114, %115 : vector<128x128xf32>
      %117 = vector.broadcast %113 : vector<128x1xf32> to vector<128x128xf32>
      %118 = arith.subf %116, %117 : vector<128x128xf32>
      %119 = vector.broadcast %12 : vector<1x128xf32> to vector<128x128xf32>
      %120 = arith.addf %118, %119 : vector<128x128xf32>
      %121 = math.exp %120 : vector<128x128xf32>
      %122 = vector.broadcast %99 : vector<1x128xf32> to vector<128x128xf32>
      %123 = arith.mulf %121, %122 : vector<128x128xf32>
      %cst_44 = arith.constant dense<0.000000e+00> : vector<128xf32>
      %124 = vector.multi_reduction <add>, %121, %cst_44 [1] : vector<128x128xf32> to vector<128xf32>
      %125 = vector.shape_cast %124 : vector<128xf32> to vector<128x1xf32>
      %cst_45 = arith.constant dense<0.000000e+00> : vector<128xf32>
      %126 = vector.multi_reduction <add>, %123, %cst_45 [1] : vector<128x128xf32> to vector<128xf32>
      %127 = vector.shape_cast %126 : vector<128xf32> to vector<128x1xf32>
      %128 = tpu.reciprocal %125 {approx = true} : vector<128x1xf32> -> vector<128x1xf32>
      %129 = arith.mulf %127, %128 : vector<128x1xf32>
      %c32_i32 = arith.constant 32 : i32
      %130 = arith.addi %c32_i32, %arg6 : i32
      %131 = arith.index_cast %130 : i32 to index
      %c0_46 = arith.constant 0 : index
      %132 = vector.load %arg2[%131, %c0_46] : memref<464x128xf32, #tpu.memory_space<vmem>>, vector<1x3xf32>
      %133 = vector.broadcast %129 : vector<128x1xf32> to vector<128x3xf32>
      %134 = vector.broadcast %132 : vector<1x3xf32> to vector<128x3xf32>
      %135 = arith.mulf %133, %134 : vector<128x3xf32>
      %136 = arith.addf %arg7, %135 : vector<128x3xf32>
      scf.yield %136 : vector<128x3xf32>
    }
    %c3_i32_9 = arith.constant 3 : i32
    %c40 = arith.constant 40 : index
    %c0_10 = arith.constant 0 : index
    %16 = vector.load %arg2[%c40, %c0_10] : memref<464x128xf32, #tpu.memory_space<vmem>>, vector<3x1xf32>
    %17 = tpu.transpose %15, [1, 0] : vector<128x3xf32> -> vector<3x128xf32>
    %18 = vector.broadcast %16 : vector<3x1xf32> to vector<3x128xf32>
    %19 = arith.addf %17, %18 : vector<3x128xf32>
    %c48 = arith.constant 48 : index
    %c0_11 = arith.constant 0 : index
    %20 = vector.load %arg2[%c48, %c0_11] : memref<464x128xf32, #tpu.memory_space<vmem>>, vector<3x1xf32>
    %c56 = arith.constant 56 : index
    %c0_12 = arith.constant 0 : index
    %21 = vector.load %arg2[%c56, %c0_12] : memref<464x128xf32, #tpu.memory_space<vmem>>, vector<3x1xf32>
    %22 = arith.addf %4, %19 : vector<3x128xf32>
    %cst_13 = arith.constant dense<0.000000e+00> : vector<128xf32>
    %23 = vector.multi_reduction <add>, %22, %cst_13 [0] : vector<3x128xf32> to vector<128xf32>
    %24 = vector.shape_cast %23 : vector<128xf32> to vector<1x128xf32>
    %cst_14 = arith.constant 3.000000e+00 : f32
    %25 = vector.broadcast %cst_14 : f32 to vector<1x128xf32>
    %26 = arith.divf %24, %25 : vector<1x128xf32>
    %27 = vector.broadcast %26 : vector<1x128xf32> to vector<3x128xf32>
    %28 = arith.subf %22, %27 : vector<3x128xf32>
    %29 = arith.mulf %28, %28 : vector<3x128xf32>
    %cst_15 = arith.constant dense<0.000000e+00> : vector<128xf32>
    %30 = vector.multi_reduction <add>, %29, %cst_15 [0] : vector<3x128xf32> to vector<128xf32>
    %31 = vector.shape_cast %30 : vector<128xf32> to vector<1x128xf32>
    %cst_16 = arith.constant 3.000000e+00 : f32
    %32 = vector.broadcast %cst_16 : f32 to vector<1x128xf32>
    %33 = arith.divf %31, %32 : vector<1x128xf32>
    %34 = vector.broadcast %26 : vector<1x128xf32> to vector<3x128xf32>
    %35 = arith.subf %22, %34 : vector<3x128xf32>
    %cst_17 = arith.constant 9.99999974E-6 : f32
    %36 = vector.broadcast %cst_17 : f32 to vector<1x128xf32>
    %37 = arith.addf %33, %36 : vector<1x128xf32>
    %38 = math.rsqrt %37 : vector<1x128xf32>
    %39 = vector.broadcast %38 : vector<1x128xf32> to vector<3x128xf32>
    %40 = arith.mulf %35, %39 : vector<3x128xf32>
    %41 = vector.broadcast %20 : vector<3x1xf32> to vector<3x128xf32>
    %42 = arith.mulf %40, %41 : vector<3x128xf32>
    %43 = vector.broadcast %21 : vector<3x1xf32> to vector<3x128xf32>
    %44 = arith.addf %42, %43 : vector<3x128xf32>
    %c80 = arith.constant 80 : index
    %c0_18 = arith.constant 0 : index
    %45 = vector.load %arg2[%c80, %c0_18] : memref<464x128xf32, #tpu.memory_space<vmem>>, vector<64x3xf32>
    %c144 = arith.constant 144 : index
    %c0_19 = arith.constant 0 : index
    %46 = vector.load %arg2[%c144, %c0_19] : memref<464x128xf32, #tpu.memory_space<vmem>>, vector<64x1xf32>
    %c208 = arith.constant 208 : index
    %c0_20 = arith.constant 0 : index
    %47 = vector.load %arg2[%c208, %c0_20] : memref<464x128xf32, #tpu.memory_space<vmem>>, vector<3x64xf32>
    %c216 = arith.constant 216 : index
    %c0_21 = arith.constant 0 : index
    %48 = vector.load %arg2[%c216, %c0_21] : memref<464x128xf32, #tpu.memory_space<vmem>>, vector<3x1xf32>
    %cst_22 = arith.constant dense<0.000000e+00> : vector<64x128xf32>
    %49 = tpu.matmul %45, %44, %cst_22 {dimension_numbers = #tpu.dot_dimension_numbers<[1], [0], [0], [1], [0, 0, 1, 1], [], []>} : vector<64x3xf32>, vector<3x128xf32>, vector<64x128xf32> -> vector<64x128xf32>
    %50 = vector.broadcast %46 : vector<64x1xf32> to vector<64x128xf32>
    %51 = arith.addf %49, %50 : vector<64x128xf32>
    %cst_23 = arith.constant 0.000000e+00 : f32
    %52 = vector.broadcast %cst_23 : f32 to vector<64x128xf32>
    %53 = arith.maximumf %51, %52 : vector<64x128xf32>
    %cst_24 = arith.constant dense<0.000000e+00> : vector<3x128xf32>
    %54 = tpu.matmul %47, %53, %cst_24 {dimension_numbers = #tpu.dot_dimension_numbers<[1], [0], [0], [1], [0, 0, 1, 1], [], []>} : vector<3x64xf32>, vector<64x128xf32>, vector<3x128xf32> -> vector<3x128xf32>
    %55 = vector.broadcast %48 : vector<3x1xf32> to vector<3x128xf32>
    %56 = arith.addf %54, %55 : vector<3x128xf32>
    %c64 = arith.constant 64 : index
    %c0_25 = arith.constant 0 : index
    %57 = vector.load %arg2[%c64, %c0_25] : memref<464x128xf32, #tpu.memory_space<vmem>>, vector<3x1xf32>
    %c72 = arith.constant 72 : index
    %c0_26 = arith.constant 0 : index
    %58 = vector.load %arg2[%c72, %c0_26] : memref<464x128xf32, #tpu.memory_space<vmem>>, vector<3x1xf32>
    %59 = arith.addf %44, %56 : vector<3x128xf32>
    %cst_27 = arith.constant dense<0.000000e+00> : vector<128xf32>
    %60 = vector.multi_reduction <add>, %59, %cst_27 [0] : vector<3x128xf32> to vector<128xf32>
    %61 = vector.shape_cast %60 : vector<128xf32> to vector<1x128xf32>
    %cst_28 = arith.constant 3.000000e+00 : f32
    %62 = vector.broadcast %cst_28 : f32 to vector<1x128xf32>
    %63 = arith.divf %61, %62 : vector<1x128xf32>
    %64 = vector.broadcast %63 : vector<1x128xf32> to vector<3x128xf32>
    %65 = arith.subf %59, %64 : vector<3x128xf32>
    %66 = arith.mulf %65, %65 : vector<3x128xf32>
    %cst_29 = arith.constant dense<0.000000e+00> : vector<128xf32>
    %67 = vector.multi_reduction <add>, %66, %cst_29 [0] : vector<3x128xf32> to vector<128xf32>
    %68 = vector.shape_cast %67 : vector<128xf32> to vector<1x128xf32>
    %cst_30 = arith.constant 3.000000e+00 : f32
    %69 = vector.broadcast %cst_30 : f32 to vector<1x128xf32>
    %70 = arith.divf %68, %69 : vector<1x128xf32>
    %71 = vector.broadcast %63 : vector<1x128xf32> to vector<3x128xf32>
    %72 = arith.subf %59, %71 : vector<3x128xf32>
    %cst_31 = arith.constant 9.99999974E-6 : f32
    %73 = vector.broadcast %cst_31 : f32 to vector<1x128xf32>
    %74 = arith.addf %70, %73 : vector<1x128xf32>
    %75 = math.rsqrt %74 : vector<1x128xf32>
    %76 = vector.broadcast %75 : vector<1x128xf32> to vector<3x128xf32>
    %77 = arith.mulf %72, %76 : vector<3x128xf32>
    %78 = vector.broadcast %57 : vector<3x1xf32> to vector<3x128xf32>
    %79 = arith.mulf %77, %78 : vector<3x128xf32>
    %80 = vector.broadcast %58 : vector<3x1xf32> to vector<3x128xf32>
    %81 = arith.addf %79, %80 : vector<3x128xf32>
    %c0_32 = arith.constant 0 : index
    %c0_33 = arith.constant 0 : index
    %82 = vector.load %arg4[%c0_32, %c0_33] : memref<3x128xf32, #tpu.memory_space<vmem>>, vector<3x128xf32>
    tpu.vector_store %arg4[%c0_32, %c0_33], %81 {strides = array<i32>} : memref<3x128xf32, #tpu.memory_space<vmem>>, vector<3x128xf32>,
    return
  }
  func.func @transform_0(%arg0: i32) -> (i32, i32) {
    %c0_i32 = arith.constant 0 : i32
    %c0_i32_0 = arith.constant 0 : i32
    %c0_i32_1 = arith.constant 0 : i32
    return %c0_i32, %c0_i32_0 : i32, i32
  }
  func.func @transform_1(%arg0: i32) -> (i32, i32) {
    %c0_i32 = arith.constant 0 : i32
    %c0_i32_0 = arith.constant 0 : i32
    %c0_i32_1 = arith.constant 0 : i32
    return %c0_i32, %c0_i32_0 : i32, i32
  }
  func.func @transform_2(%arg0: i32) -> (i32, i32) {
    %c0_i32 = arith.constant 0 : i32
    %c0_i32_0 = arith.constant 0 : i32
    %c0_i32_1 = arith.constant 0 : i32
    return %c0_i32, %c0_i32_0 : i32, i32
  }
  func.func @transform_3(%arg0: i32) -> (i32, i32) {
    %c0_i32 = arith.constant 0 : i32
    %c0_i32_0 = arith.constant 0 : i32
    return %c0_i32, %arg0 : i32, i32
  }
}

</mosaic_0001>

<llo_original>
// kernel: tpu_custom_call.1
$region0: #{tpu_custom_call.1}
  #allocation0 [shape = 'u32[]', space=smem, size = 0x4, offset = 0x4, fixed_abs, tag = 'smem constant byte address 0x4 - core index']
  #allocation1 [shape = 'u32[144,128]{1,0:T(1,128)}', space=vmem, size = 0x12000, scoped, tag = 'internal scratch']
  #allocation2 [shape = 'f32[6,128]{1,0:T(8,128)}', space=vmem, size = 0x1000, scoped, tag = 'scratch operand']
  %s0 = inlined_call_operand.hbm [shape: f32[3,128], index: 0, kind: input, shape index: {}]
  %s1 = inlined_call_operand.hbm [shape: f32[464,128], index: 1, kind: input, shape index: {}]
  %s2 = inlined_call_operand.vmem [shape: f32[1,128], index: 2, kind: input, shape index: {}]
  %s3 = inlined_call_operand.hbm [shape: f32[3,128], index: 3, kind: output, shape index: {}]
  %s4 = sld [smem:[#allocation0]]
  $region37: #{tpu_custom_call.1} parent=0
    _
  %s6 = ssub.s32 1, %s4
  %s7 = scalar_select 0, %s6, %s4
  $region1: #{tpu_custom_call.1} parent=0
    #allocation3 [shape = 'u8[2048]{0}', space=vmem, size = 0x800, scoped, tag = 'input window, operand 0, single buffered']
    #allocation4 [shape = 's32[1]{0}', space=sflag, size = 0x4, scoped, tag = 'scoped memory for tpu_custom_call.1']
    #allocation5 [shape = 's32[1]{0}', space=sflag, size = 0x4, scoped, tag = 'scoped memory for tpu_custom_call.1']
    #allocation6 [shape = 'u8[237568]{0}', space=vmem, size = 0x3a000, scoped, tag = 'input window, operand 1, single buffered']
    #allocation7 [shape = 's32[1]{0}', space=sflag, size = 0x4, scoped, tag = 'scoped memory for tpu_custom_call.1']
    #allocation8 [shape = 'u8[2048]{0}', space=vmem, size = 0x800, scoped, tag = 'output window, operand 0, single buffered']
    %8 = vsyncpa [#allocation4], 0
    %9 = vsyncpa [#allocation7], 0
    %10 = vsyncpa [#allocation5], 0
    // Predicated region
    $region2: #{tpu_custom_call.1} parent=1 // pred_check
      _
    $region3: #{tpu_custom_call.1} parent=1 // pred_check_branch
      %12 = sbr.rel (0) target = $region5
    $region4: #{tpu_custom_call.1} parent=1 // pred_region
      %s14 = ssub.s32 64, 64
      %15 = vsyncadd [#allocation4], %s14
      %s17 = sshll.u32 [#allocation3], 4
      %s18 = int_to_ptr.vmem [resolvable:$true] %s17
      %20 = dma.hbm_to_vmem [thread:$0]  %s0, 64, %s18, [#allocation4]
    $region5: #{tpu_custom_call.1} parent=1 // pred_fallthru
      _
    // Predicated region
    $region6: #{tpu_custom_call.1} parent=1 // pred_check
      _
    $region7: #{tpu_custom_call.1} parent=1 // pred_check_branch
      %22 = sbr.rel (0) target = $region9
    $region8: #{tpu_custom_call.1} parent=1 // pred_region
      %s24 = ssub.s32 7424, 7424
      %25 = vsyncadd [#allocation7], %s24
      %s26 = sshll.u32 [#allocation6], 4
      %s27 = int_to_ptr.vmem [resolvable:$true] %s26
      %32 = dma.hbm_to_vmem [thread:$0]  %s1, 7424, %s27, [#allocation7], 128, 128, 8
    $region9: #{tpu_custom_call.1} parent=1 // pred_fallthru
      _
    // Predicated region
    $region10: #{tpu_custom_call.1} parent=1 // pred_check
      _
    $region11: #{tpu_custom_call.1} parent=1 // pred_check_branch
      %34 = sbr.rel (0) target = $region13
    $region12: #{tpu_custom_call.1} parent=1 // pred_region
      _
    $region13: #{tpu_custom_call.1} parent=1 // pred_fallthru
      _
    // Predicated region
    $region14: #{tpu_custom_call.1} parent=1 // pred_check
      _
    $region15: #{tpu_custom_call.1} parent=1 // pred_check_branch
      %36 = sbr.rel (0) target = $region17
    $region16: #{tpu_custom_call.1} parent=1 // pred_region
      %37 = dma.done [#allocation4], 64
    $region17: #{tpu_custom_call.1} parent=1 // pred_fallthru
      _
    // Predicated region
    $region18: #{tpu_custom_call.1} parent=1 // pred_check
      _
    $region19: #{tpu_custom_call.1} parent=1 // pred_check_branch
      %39 = sbr.rel (0) target = $region21
    $region20: #{tpu_custom_call.1} parent=1 // pred_region
      %40 = dma.done [#allocation7], 7424
    $region21: #{tpu_custom_call.1} parent=1 // pred_fallthru
      _
    %s41 = smul.u32 0, 128
    %v42 = vld [vmem:[#allocation3] sm:$0x7]
    %s43 = sshra.s32 %s41, 7
    %s44 = sand.u32 %s41, 127
    %s45 = scalar_lea.vmem [#allocation3], %s43
    %v46 = vld [vmem:[%s45] sm:$0x7]
    %47 = vxpose.xlu0.b32.start [1/16] %v46, 128
    %48 = vxpose.xlu0.b32.cont [2/16] 0.0, 128
    %49 = vxpose.xlu0.b32.cont [3/16] 0.0, 128
    %50 = vxpose.xlu0.b32.cont [4/16] 0.0, 128
    %51 = vxpose.xlu0.b32.cont [5/16] 0.0, 128
    %52 = vxpose.xlu0.b32.cont [6/16] 0.0, 128
    %53 = vxpose.xlu0.b32.cont [7/16] 0.0, 128
    %54 = vxpose.xlu0.b32.cont [8/16] 0.0, 128
    %55 = vxpose.xlu0.b32.cont [9/16] 0.0, 128
    %56 = vxpose.xlu0.b32.cont [10/16] 0.0, 128
    %57 = vxpose.xlu0.b32.cont [11/16] 0.0, 128
    %58 = vxpose.xlu0.b32.cont [12/16] 0.0, 128
    %59 = vxpose.xlu0.b32.cont [13/16] 0.0, 128
    %60 = vxpose.xlu0.b32.cont [14/16] 0.0, 128
    %61 = vxpose.xlu0.b32.cont [15/16] 0.0, 128
    %62 = vxpose.xlu0.b32.end [16/16] 0.0, 128
    %v63 = vpop.trf.xlu0
    %v64 = vpop.trf.xlu0
    %v65 = vpop.trf.xlu0
    %v66 = vpop.trf.xlu0
    %v67 = vpop.trf.xlu0
    %v68 = vpop.trf.xlu0
    %v69 = vpop.trf.xlu0
    %v70 = vpop.trf.xlu0
    %v71 = vpop.trf.xlu0
    %v72 = vpop.trf.xlu0
    %v73 = vpop.trf.xlu0
    %v74 = vpop.trf.xlu0
    %v75 = vpop.trf.xlu0
    %v76 = vpop.trf.xlu0
    %v77 = vpop.trf.xlu0
    %v78 = vpop.trf.xlu0
    %v79 = vld [vmem:[#allocation6 + $0x10] sm:$0x3f]
    %v80 = vld [vmem:[#allocation6 + $0x18] sm:$0x3f]
    %82 = vset.pattern.permute.xlu0 0
    %83 = vperm.xlu0 %82, %v80
    %v84 = vpop.permute.xlu0 %83
    %vm86 = vcmask 23552
    %v88 = vsel %vm86, %v79, 0
    %vm90 = vcmask 1042432
    %v92 = vsel %vm90, %v42, 0
    %94 = vmatprep.subr.mxu0 0.0
    %95 = vmatpush1.msra.mxu0 %v92
    %96 = vmatprep.subr.mxu0 0.0
    %97 = vmatpush1.msra.mxu0 0.0
    %98 = vmatprep.subr.mxu0 0.0
    %99 = vmatpush1.msra.mxu0 0.0
    %100 = vmatprep.subr.mxu0 0.0
    %101 = vmatpush1.msra.mxu0 0.0
    %102 = vmatprep.subr.mxu0 0.0
    %103 = vmatpush1.msra.mxu0 0.0
    %104 = vmatprep.subr.mxu0 0.0
    %105 = vmatpush1.msra.mxu0 0.0
    %106 = vmatprep.subr.mxu0 0.0
    %107 = vmatpush1.msra.mxu0 0.0
    %108 = vmatprep.subr.mxu0 0.0
    %109 = vmatpush1.msra.mxu0 0.0
    %110 = vmatprep.subr.mxu0 0.0
    %111 = vmatpush1.msra.mxu0 0.0
    %112 = vmatprep.subr.mxu0 0.0
    %113 = vmatpush1.msra.mxu0 0.0
    %114 = vmatprep.subr.mxu0 0.0
    %115 = vmatpush1.msra.mxu0 0.0
    %116 = vmatprep.subr.mxu0 0.0
    %117 = vmatpush1.msra.mxu0 0.0
    %118 = vmatprep.subr.mxu0 0.0
    %119 = vmatpush1.msra.mxu0 0.0
    %120 = vmatprep.subr.mxu0 0.0
    %121 = vmatpush1.msra.mxu0 0.0
    %122 = vmatprep.subr.mxu0 0.0
    %123 = vmatpush1.msra.mxu0 0.0
    %124 = vmatprep.subr.mxu0 0.0
    %125 = vmatpush1.msra.mxu0 0.0
    %126 = vmatprep.subr.mxu0 0.0
    %127 = vmatpush1.msra.mxu0 0.0
    %128 = vmatprep.subr.mxu0 0.0
    %129 = vmatpush1.msra.mxu0 0.0
    %130 = vmatprep.subr.mxu0 0.0
    %131 = vmatpush1.msra.mxu0 0.0
    %132 = vmatprep.subr.mxu0 0.0
    %133 = vmatpush1.msra.mxu0 0.0
    %134 = vmatprep.subr.mxu0 0.0
    %135 = vmatpush1.msra.mxu0 0.0
    %136 = vmatprep.subr.mxu0 0.0
    %137 = vmatpush1.msra.mxu0 0.0
    %138 = vmatprep.subr.mxu0 0.0
    %139 = vmatpush1.msra.mxu0 0.0
    %140 = vmatprep.subr.mxu0 0.0
    %141 = vmatpush1.msra.mxu0 0.0
    %142 = vmatprep.subr.mxu0 0.0
    %143 = vmatpush1.msra.mxu0 0.0
    %144 = vmatprep.subr.mxu0 0.0
    %145 = vmatpush1.msra.mxu0 0.0
    %146 = vmatprep.subr.mxu0 0.0
    %147 = vmatpush1.msra.mxu0 0.0
    %148 = vmatprep.subr.mxu0 0.0
    %149 = vmatpush1.msra.mxu0 0.0
    %150 = vmatprep.subr.mxu0 0.0
    %151 = vmatpush1.msra.mxu0 0.0
    %152 = vmatprep.subr.mxu0 0.0
    %153 = vmatpush1.msra.mxu0 0.0
    %154 = vmatprep.subr.mxu0 0.0
    %155 = vmatpush1.msra.mxu0 0.0
    %156 = vmatprep.subr.mxu0 0.0
    %157 = vmatpush1.msra.mxu0 0.0
    %158 = vmatprep.mubr.f32.mxu0 0.0
    %159 = vmatmul.mubr.f32.gmra.mrb[0].mxu0 %v88
    %v160 = vpop.f32.mrb[0].mxu0
    %v161 = vadd.f32 %v84, %v160
    %v162 = vpop.f32.mrb[0].mxu0
    %163 = vdwg.mxu0
    %164 = vst [vmem:[#allocation2] sm:$0x3f] %v161
    %v165 = vld [vmem:[%s2] sm:$0x1]
    loop: start=0, step=1, limit=3
    $region22: #{tpu_custom_call.1} parent=1 // loop_pre_header
      _
    $region23: #{tpu_custom_call.1} parent=1 // loop_header
      %s167 = sphi 0, %s171
      %p168 = scmp.ge.s32.totalorder %s167, 3
      %v172 = vphi 0.0, %v740
      %v173 = vphi 0.0, %v741
      %v174 = vphi 0.0, %v742
      %v175 = vphi 0.0, %v743
      %v176 = vphi 0.0, %v744
      %v177 = vphi 0.0, %v745
      %v178 = vphi 0.0, %v746
      %v179 = vphi 0.0, %v747
      %v180 = vphi 0.0, %v748
      %v181 = vphi 0.0, %v749
      %v182 = vphi 0.0, %v750
      %v183 = vphi 0.0, %v751
      %v184 = vphi 0.0, %v752
      %v185 = vphi 0.0, %v753
      %v186 = vphi 0.0, %v754
      %v187 = vphi 0.0, %v755
    $region24: #{tpu_custom_call.1} parent=1 // loop_header_branch
      %170 = sbr.rel (%p168) target = $region28
    $region25: #{tpu_custom_call.1} parent=1 // loop_body
      %s188 = scalar_lea.vmem [#allocation6], %s167
      %v189 = vld [vmem:[%s188] sm:$0x1]
      %s190 = sadd.s32 %s167, 8
      %s191 = scalar_lea.vmem [#allocation6], %s190
      %v192 = vld [vmem:[%s191] sm:$0x1]
      %v193 = vlaneseq
      %v194 = vshrl.u32 %v193, 7
      %v195 = vsub.s32 0, %v194
      %v196 = vrot.slane %v189, %v195
      %v197 = vmul.f32 %v63, %v196
      %v198 = vmul.f32 %v64, %v196
      %v199 = vmul.f32 %v65, %v196
      %v200 = vmul.f32 %v66, %v196
      %v201 = vmul.f32 %v67, %v196
      %v202 = vmul.f32 %v68, %v196
      %v203 = vmul.f32 %v69, %v196
      %v204 = vmul.f32 %v70, %v196
      %v205 = vmul.f32 %v71, %v196
      %v206 = vmul.f32 %v72, %v196
      %v207 = vmul.f32 %v73, %v196
      %v208 = vmul.f32 %v74, %v196
      %v209 = vmul.f32 %v75, %v196
      %v210 = vmul.f32 %v76, %v196
      %v211 = vmul.f32 %v77, %v196
      %v212 = vmul.f32 %v78, %v196
      %v213 = vsel %vm86, %v197, 0.0
      %214 = vadd.xlane.f32.xlu0 %v213
      %v215 = vpop.xlane.xlu0 %214
      %v216 = vsel %vm86, %v198, 0.0
      %217 = vadd.xlane.f32.xlu0 %v216
      %v218 = vpop.xlane.xlu0 %217
      %v219 = vsel %vm86, %v199, 0.0
      %220 = vadd.xlane.f32.xlu0 %v219
      %v221 = vpop.xlane.xlu0 %220
      %v222 = vsel %vm86, %v200, 0.0
      %223 = vadd.xlane.f32.xlu0 %v222
      %v224 = vpop.xlane.xlu0 %223
      %v225 = vsel %vm86, %v201, 0.0
      %226 = vadd.xlane.f32.xlu0 %v225
      %v227 = vpop.xlane.xlu0 %226
      %v228 = vsel %vm86, %v202, 0.0
      %229 = vadd.xlane.f32.xlu0 %v228
      %v230 = vpop.xlane.xlu0 %229
      %v231 = vsel %vm86, %v203, 0.0
      %232 = vadd.xlane.f32.xlu0 %v231
      %v233 = vpop.xlane.xlu0 %232
      %v234 = vsel %vm86, %v204, 0.0
      %235 = vadd.xlane.f32.xlu0 %v234
      %v236 = vpop.xlane.xlu0 %235
      %v237 = vsel %vm86, %v205, 0.0
      %238 = vadd.xlane.f32.xlu0 %v237
      %v239 = vpop.xlane.xlu0 %238
      %v240 = vsel %vm86, %v206, 0.0
      %241 = vadd.xlane.f32.xlu0 %v240
      %v242 = vpop.xlane.xlu0 %241
      %v243 = vsel %vm86, %v207, 0.0
      %244 = vadd.xlane.f32.xlu0 %v243
      %v245 = vpop.xlane.xlu0 %244
      %v246 = vsel %vm86, %v208, 0.0
      %247 = vadd.xlane.f32.xlu0 %v246
      %v248 = vpop.xlane.xlu0 %247
      %v249 = vsel %vm86, %v209, 0.0
      %250 = vadd.xlane.f32.xlu0 %v249
      %v251 = vpop.xlane.xlu0 %250
      %v252 = vsel %vm86, %v210, 0.0
      %253 = vadd.xlane.f32.xlu0 %v252
      %v254 = vpop.xlane.xlu0 %253
      %v255 = vsel %vm86, %v211, 0.0
      %256 = vadd.xlane.f32.xlu0 %v255
      %v257 = vpop.xlane.xlu0 %256
      %v258 = vsel %vm86, %v212, 0.0
      %259 = vadd.xlane.f32.xlu0 %v258
      %v260 = vpop.xlane.xlu0 %259
      %v261 = vlaneseq
      %v262 = vshrl.u32 %v261, 7
      %v263 = vsub.s32 0, %v262
      %v264 = vrot.slane %v192, %v263
      %v265 = vadd.f32 %v215, %v264
      %v266 = vadd.f32 %v218, %v264
      %v267 = vadd.f32 %v221, %v264
      %v268 = vadd.f32 %v224, %v264
      %v269 = vadd.f32 %v227, %v264
      %v270 = vadd.f32 %v230, %v264
      %v271 = vadd.f32 %v233, %v264
      %v272 = vadd.f32 %v236, %v264
      %v273 = vadd.f32 %v239, %v264
      %v274 = vadd.f32 %v242, %v264
      %v275 = vadd.f32 %v245, %v264
      %v276 = vadd.f32 %v248, %v264
      %v277 = vadd.f32 %v251, %v264
      %v278 = vadd.f32 %v254, %v264
      %v279 = vadd.f32 %v257, %v264
      %v280 = vadd.f32 %v260, %v264
      %s281 = scalar_lea.vmem [#allocation2], %s167
      %v282 = vld [vmem:[%s281] sm:$0x1]
      %s283 = sadd.s32 %s167, 3
      %s284 = scalar_lea.vmem [#allocation2], %s283
      %v285 = vld [vmem:[%s284] sm:$0x1]
      %v286 = vadd.f32 %v282, %v165
      %vm287 = vcmask 1040384
      %v288 = vsel %vm287, %v286, -inf
      %289 = vmax.xlane.f32.xlu0 %v288
      %v290 = vpop.xlane.xlu0 %289
      %v291 = vsub.f32 %v282, %v165
      %v292 = vsel %vm287, %v291, inf
      %293 = vmin.xlane.f32.xlu0 %v292
      %v294 = vpop.xlane.xlu0 %293
      %vm295 = vcmp.ge.f32.partialorder %v265, 0.0
      %vm296 = vcmp.ge.f32.partialorder %v266, 0.0
      %vm297 = vcmp.ge.f32.partialorder %v267, 0.0
      %vm298 = vcmp.ge.f32.partialorder %v268, 0.0
      %vm299 = vcmp.ge.f32.partialorder %v269, 0.0
      %vm300 = vcmp.ge.f32.partialorder %v270, 0.0
      %vm301 = vcmp.ge.f32.partialorder %v271, 0.0
      %vm302 = vcmp.ge.f32.partialorder %v272, 0.0
      %vm303 = vcmp.ge.f32.partialorder %v273, 0.0
      %vm304 = vcmp.ge.f32.partialorder %v274, 0.0
      %vm305 = vcmp.ge.f32.partialorder %v275, 0.0
      %vm306 = vcmp.ge.f32.partialorder %v276, 0.0
      %vm307 = vcmp.ge.f32.partialorder %v277, 0.0
      %vm308 = vcmp.ge.f32.partialorder %v278, 0.0
      %vm309 = vcmp.ge.f32.partialorder %v279, 0.0
      %vm310 = vcmp.ge.f32.partialorder %v280, 0.0
      %v311 = vlaneseq
      %v312 = vshrl.u32 %v311, 7
      %v313 = vsub.s32 0, %v312
      %v314 = vrot.slane %v290, %v313
      %v315 = vlaneseq
      %v316 = vshrl.u32 %v315, 7
      %v317 = vsub.s32 0, %v316
      %v318 = vrot.slane %v294, %v317
      %v319 = vsel %vm295, %v314, %v318
      %v320 = vsel %vm296, %v314, %v318
      %v321 = vsel %vm297, %v314, %v318
      %v322 = vsel %vm298, %v314, %v318
      %v323 = vsel %vm299, %v314, %v318
      %v324 = vsel %vm300, %v314, %v318
      %v325 = vsel %vm301, %v314, %v318
      %v326 = vsel %vm302, %v314, %v318
      %v327 = vsel %vm303, %v314, %v318
      %v328 = vsel %vm304, %v314, %v318
      %v329 = vsel %vm305, %v314, %v318
      %v330 = vsel %vm306, %v314, %v318
      %v331 = vsel %vm307, %v314, %v318
      %v332 = vsel %vm308, %v314, %v318
      %v333 = vsel %vm309, %v314, %v318
      %v334 = vsel %vm310, %v314, %v318
      %v335 = vmul.f32 %v265, %v319
      %v336 = vmul.f32 %v266, %v320
      %v337 = vmul.f32 %v267, %v321
      %v338 = vmul.f32 %v268, %v322
      %v339 = vmul.f32 %v269, %v323
      %v340 = vmul.f32 %v270, %v324
      %v341 = vmul.f32 %v271, %v325
      %v342 = vmul.f32 %v272, %v326
      %v343 = vmul.f32 %v273, %v327
      %v344 = vmul.f32 %v274, %v328
      %v345 = vmul.f32 %v275, %v329
      %v346 = vmul.f32 %v276, %v330
      %v347 = vmul.f32 %v277, %v331
      %v348 = vmul.f32 %v278, %v332
      %v349 = vmul.f32 %v279, %v333
      %v350 = vmul.f32 %v280, %v334
      %352 = vset.pattern.permute.xlu0 0
      %353 = vperm.xlu0 %352, %v265
      %v354 = vpop.permute.xlu0 %353
      %357 = vset.pattern.permute.xlu0 0
      %358 = vperm.xlu0 %357, %v266
      %v359 = vpop.permute.xlu0 %358
      %362 = vset.pattern.permute.xlu0 0
      %363 = vperm.xlu0 %362, %v267
      %v364 = vpop.permute.xlu0 %363
      %367 = vset.pattern.permute.xlu0 0
      %368 = vperm.xlu0 %367, %v268
      %v369 = vpop.permute.xlu0 %368
      %372 = vset.pattern.permute.xlu0 0
      %373 = vperm.xlu0 %372, %v269
      %v374 = vpop.permute.xlu0 %373
      %377 = vset.pattern.permute.xlu0 0
      %378 = vperm.xlu0 %377, %v270
      %v379 = vpop.permute.xlu0 %378
      %382 = vset.pattern.permute.xlu0 0
      %383 = vperm.xlu0 %382, %v271
      %v384 = vpop.permute.xlu0 %383
      %387 = vset.pattern.permute.xlu0 0
      %388 = vperm.xlu0 %387, %v272
      %v389 = vpop.permute.xlu0 %388
      %392 = vset.pattern.permute.xlu0 0
      %393 = vperm.xlu0 %392, %v273
      %v394 = vpop.permute.xlu0 %393
      %397 = vset.pattern.permute.xlu0 0
      %398 = vperm.xlu0 %397, %v274
      %v399 = vpop.permute.xlu0 %398
      %402 = vset.pattern.permute.xlu0 0
      %403 = vperm.xlu0 %402, %v275
      %v404 = vpop.permute.xlu0 %403
      %407 = vset.pattern.permute.xlu0 0
      %408 = vperm.xlu0 %407, %v276
      %v409 = vpop.permute.xlu0 %408
      %412 = vset.pattern.permute.xlu0 0
      %413 = vperm.xlu0 %412, %v277
      %v414 = vpop.permute.xlu0 %413
      %417 = vset.pattern.permute.xlu0 0
      %418 = vperm.xlu0 %417, %v278
      %v419 = vpop.permute.xlu0 %418
      %422 = vset.pattern.permute.xlu0 0
      %423 = vperm.xlu0 %422, %v279
      %v424 = vpop.permute.xlu0 %423
      %427 = vset.pattern.permute.xlu0 0
      %428 = vperm.xlu0 %427, %v280
      %v429 = vpop.permute.xlu0 %428
      %v431 = vlaneseq
      %v432 = vshrl.u32 %v431, 7
      %v433 = vsub.s32 0, %v432
      %v434 = vrot.slane %v282, %v433
      %v435 = vmul.f32 %v354, %v434
      %v436 = vmul.f32 %v359, %v434
      %v437 = vmul.f32 %v364, %v434
      %v438 = vmul.f32 %v369, %v434
      %v439 = vmul.f32 %v374, %v434
      %v440 = vmul.f32 %v379, %v434
      %v441 = vmul.f32 %v384, %v434
      %v442 = vmul.f32 %v389, %v434
      %v443 = vmul.f32 %v394, %v434
      %v444 = vmul.f32 %v399, %v434
      %v445 = vmul.f32 %v404, %v434
      %v446 = vmul.f32 %v409, %v434
      %v447 = vmul.f32 %v414, %v434
      %v448 = vmul.f32 %v419, %v434
      %v449 = vmul.f32 %v424, %v434
      %v450 = vmul.f32 %v429, %v434
      %452 = vset.pattern.permute.xlu0 0
      %453 = vperm.xlu0 %452, %v335
      %v454 = vpop.permute.xlu0 %453
      %457 = vset.pattern.permute.xlu0 0
      %458 = vperm.xlu0 %457, %v336
      %v459 = vpop.permute.xlu0 %458
      %462 = vset.pattern.permute.xlu0 0
      %463 = vperm.xlu0 %462, %v337
      %v464 = vpop.permute.xlu0 %463
      %467 = vset.pattern.permute.xlu0 0
      %468 = vperm.xlu0 %467, %v338
      %v469 = vpop.permute.xlu0 %468
      %472 = vset.pattern.permute.xlu0 0
      %473 = vperm.xlu0 %472, %v339
      %v474 = vpop.permute.xlu0 %473
      %477 = vset.pattern.permute.xlu0 0
      %478 = vperm.xlu0 %477, %v340
      %v479 = vpop.permute.xlu0 %478
      %482 = vset.pattern.permute.xlu0 0
      %483 = vperm.xlu0 %482, %v341
      %v484 = vpop.permute.xlu0 %483
      %487 = vset.pattern.permute.xlu0 0
      %488 = vperm.xlu0 %487, %v342
      %v489 = vpop.permute.xlu0 %488
      %492 = vset.pattern.permute.xlu0 0
      %493 = vperm.xlu0 %492, %v343
      %v494 = vpop.permute.xlu0 %493
      %497 = vset.pattern.permute.xlu0 0
      %498 = vperm.xlu0 %497, %v344
      %v499 = vpop.permute.xlu0 %498
      %502 = vset.pattern.permute.xlu0 0
      %503 = vperm.xlu0 %502, %v345
      %v504 = vpop.permute.xlu0 %503
      %507 = vset.pattern.permute.xlu0 0
      %508 = vperm.xlu0 %507, %v346
      %v509 = vpop.permute.xlu0 %508
      %512 = vset.pattern.permute.xlu0 0
      %513 = vperm.xlu0 %512, %v347
      %v514 = vpop.permute.xlu0 %513
      %517 = vset.pattern.permute.xlu0 0
      %518 = vperm.xlu0 %517, %v348
      %v519 = vpop.permute.xlu0 %518
      %522 = vset.pattern.permute.xlu0 0
      %523 = vperm.xlu0 %522, %v349
      %v524 = vpop.permute.xlu0 %523
      %527 = vset.pattern.permute.xlu0 0
      %528 = vperm.xlu0 %527, %v350
      %v529 = vpop.permute.xlu0 %528
      %v531 = vsub.f32 %v435, %v454
      %v532 = vsub.f32 %v436, %v459
      %v533 = vsub.f32 %v437, %v464
      %v534 = vsub.f32 %v438, %v469
      %v535 = vsub.f32 %v439, %v474
      %v536 = vsub.f32 %v440, %v479
      %v537 = vsub.f32 %v441, %v484
      %v538 = vsub.f32 %v442, %v489
      %v539 = vsub.f32 %v443, %v494
      %v540 = vsub.f32 %v444, %v499
      %v541 = vsub.f32 %v445, %v504
      %v542 = vsub.f32 %v446, %v509
      %v543 = vsub.f32 %v447, %v514
      %v544 = vsub.f32 %v448, %v519
      %v545 = vsub.f32 %v449, %v524
      %v546 = vsub.f32 %v450, %v529
      %v548 = vlaneseq
      %v549 = vshrl.u32 %v548, 7
      %v550 = vsub.s32 0, %v549
      %v551 = vrot.slane %v165, %v550
      %v553 = vadd.f32 %v531, %v551
      %v554 = vadd.f32 %v532, %v551
      %v555 = vadd.f32 %v533, %v551
      %v556 = vadd.f32 %v534, %v551
      %v557 = vadd.f32 %v535, %v551
      %v558 = vadd.f32 %v536, %v551
      %v559 = vadd.f32 %v537, %v551
      %v560 = vadd.f32 %v538, %v551
      %v561 = vadd.f32 %v539, %v551
      %v562 = vadd.f32 %v540, %v551
      %v563 = vadd.f32 %v541, %v551
      %v564 = vadd.f32 %v542, %v551
      %v565 = vadd.f32 %v543, %v551
      %v566 = vadd.f32 %v544, %v551
      %v567 = vadd.f32 %v545, %v551
      %v568 = vadd.f32 %v546, %v551
      %v569 = vmul.f32 %v553, 1.442695
      %v570 = vpow.pop %v569
      %v571 = vmul.f32 %v554, 1.442695
      %v572 = vpow.pop %v571
      %v573 = vmul.f32 %v555, 1.442695
      %v574 = vpow.pop %v573
      %v575 = vmul.f32 %v556, 1.442695
      %v576 = vpow.pop %v575
      %v577 = vmul.f32 %v557, 1.442695
      %v578 = vpow.pop %v577
      %v579 = vmul.f32 %v558, 1.442695
      %v580 = vpow.pop %v579
      %v581 = vmul.f32 %v559, 1.442695
      %v582 = vpow.pop %v581
      %v583 = vmul.f32 %v560, 1.442695
      %v584 = vpow.pop %v583
      %v585 = vmul.f32 %v561, 1.442695
      %v586 = vpow.pop %v585
      %v587 = vmul.f32 %v562, 1.442695
      %v588 = vpow.pop %v587
      %v589 = vmul.f32 %v563, 1.442695
      %v590 = vpow.pop %v589
      %v591 = vmul.f32 %v564, 1.442695
      %v592 = vpow.pop %v591
      %v593 = vmul.f32 %v565, 1.442695
      %v594 = vpow.pop %v593
      %v595 = vmul.f32 %v566, 1.442695
      %v596 = vpow.pop %v595
      %v597 = vmul.f32 %v567, 1.442695
      %v598 = vpow.pop %v597
      %v599 = vmul.f32 %v568, 1.442695
      %v600 = vpow.pop %v599
      %v601 = vlaneseq
      %v602 = vshrl.u32 %v601, 7
      %v603 = vsub.s32 0, %v602
      %v604 = vrot.slane %v285, %v603
      %v605 = vmul.f32 %v570, %v604
      %v606 = vmul.f32 %v572, %v604
      %v607 = vmul.f32 %v574, %v604
      %v608 = vmul.f32 %v576, %v604
      %v609 = vmul.f32 %v578, %v604
      %v610 = vmul.f32 %v580, %v604
      %v611 = vmul.f32 %v582, %v604
      %v612 = vmul.f32 %v584, %v604
      %v613 = vmul.f32 %v586, %v604
      %v614 = vmul.f32 %v588, %v604
      %v615 = vmul.f32 %v590, %v604
      %v616 = vmul.f32 %v592, %v604
      %v617 = vmul.f32 %v594, %v604
      %v618 = vmul.f32 %v596, %v604
      %v619 = vmul.f32 %v598, %v604
      %v620 = vmul.f32 %v600, %v604
      %621 = vadd.xlane.f32.xlu0 %v570
      %v622 = vpop.xlane.xlu0 %621
      %623 = vadd.xlane.f32.xlu0 %v572
      %v624 = vpop.xlane.xlu0 %623
      %625 = vadd.xlane.f32.xlu0 %v574
      %v626 = vpop.xlane.xlu0 %625
      %627 = vadd.xlane.f32.xlu0 %v576
      %v628 = vpop.xlane.xlu0 %627
      %629 = vadd.xlane.f32.xlu0 %v578
      %v630 = vpop.xlane.xlu0 %629
      %631 = vadd.xlane.f32.xlu0 %v580
      %v632 = vpop.xlane.xlu0 %631
      %633 = vadd.xlane.f32.xlu0 %v582
      %v634 = vpop.xlane.xlu0 %633
      %635 = vadd.xlane.f32.xlu0 %v584
      %v636 = vpop.xlane.xlu0 %635
      %637 = vadd.xlane.f32.xlu0 %v586
      %v638 = vpop.xlane.xlu0 %637
      %639 = vadd.xlane.f32.xlu0 %v588
      %v640 = vpop.xlane.xlu0 %639
      %641 = vadd.xlane.f32.xlu0 %v590
      %v642 = vpop.xlane.xlu0 %641
      %643 = vadd.xlane.f32.xlu0 %v592
      %v644 = vpop.xlane.xlu0 %643
      %645 = vadd.xlane.f32.xlu0 %v594
      %v646 = vpop.xlane.xlu0 %645
      %647 = vadd.xlane.f32.xlu0 %v596
      %v648 = vpop.xlane.xlu0 %647
      %649 = vadd.xlane.f32.xlu0 %v598
      %v650 = vpop.xlane.xlu0 %649
      %651 = vadd.xlane.f32.xlu0 %v600
      %v652 = vpop.xlane.xlu0 %651
      %653 = vadd.xlane.f32.xlu0 %v605
      %v654 = vpop.xlane.xlu0 %653
      %655 = vadd.xlane.f32.xlu0 %v606
      %v656 = vpop.xlane.xlu0 %655
      %657 = vadd.xlane.f32.xlu0 %v607
      %v658 = vpop.xlane.xlu0 %657
      %659 = vadd.xlane.f32.xlu0 %v608
      %v660 = vpop.xlane.xlu0 %659
      %661 = vadd.xlane.f32.xlu0 %v609
      %v662 = vpop.xlane.xlu0 %661
      %663 = vadd.xlane.f32.xlu0 %v610
      %v664 = vpop.xlane.xlu0 %663
      %665 = vadd.xlane.f32.xlu0 %v611
      %v666 = vpop.xlane.xlu0 %665
      %667 = vadd.xlane.f32.xlu0 %v612
      %v668 = vpop.xlane.xlu0 %667
      %669 = vadd.xlane.f32.xlu0 %v613
      %v670 = vpop.xlane.xlu0 %669
      %671 = vadd.xlane.f32.xlu0 %v614
      %v672 = vpop.xlane.xlu0 %671
      %673 = vadd.xlane.f32.xlu0 %v615
      %v674 = vpop.xlane.xlu0 %673
      %675 = vadd.xlane.f32.xlu0 %v616
      %v676 = vpop.xlane.xlu0 %675
      %677 = vadd.xlane.f32.xlu0 %v617
      %v678 = vpop.xlane.xlu0 %677
      %679 = vadd.xlane.f32.xlu0 %v618
      %v680 = vpop.xlane.xlu0 %679
      %681 = vadd.xlane.f32.xlu0 %v619
      %v682 = vpop.xlane.xlu0 %681
      %683 = vadd.xlane.f32.xlu0 %v620
      %v684 = vpop.xlane.xlu0 %683
      %v685 = vrcp.pop %v622
      %v686 = vrcp.pop %v624
      %v687 = vrcp.pop %v626
      %v688 = vrcp.pop %v628
      %v689 = vrcp.pop %v630
      %v690 = vrcp.pop %v632
      %v691 = vrcp.pop %v634
      %v692 = vrcp.pop %v636
      %v693 = vrcp.pop %v638
      %v694 = vrcp.pop %v640
      %v695 = vrcp.pop %v642
      %v696 = vrcp.pop %v644
      %v697 = vrcp.pop %v646
      %v698 = vrcp.pop %v648
      %v699 = vrcp.pop %v650
      %v700 = vrcp.pop %v652
      %v701 = vmul.f32 %v654, %v685
      %v702 = vmul.f32 %v656, %v686
      %v703 = vmul.f32 %v658, %v687
      %v704 = vmul.f32 %v660, %v688
      %v705 = vmul.f32 %v662, %v689
      %v706 = vmul.f32 %v664, %v690
      %v707 = vmul.f32 %v666, %v691
      %v708 = vmul.f32 %v668, %v692
      %v709 = vmul.f32 %v670, %v693
      %v710 = vmul.f32 %v672, %v694
      %v711 = vmul.f32 %v674, %v695
      %v712 = vmul.f32 %v676, %v696
      %v713 = vmul.f32 %v678, %v697
      %v714 = vmul.f32 %v680, %v698
      %v715 = vmul.f32 %v682, %v699
      %v716 = vmul.f32 %v684, %v700
      %s717 = sadd.s32 %s167, 32
      %s718 = scalar_lea.vmem [#allocation6], %s717
      %v719 = vld [vmem:[%s718] sm:$0x1]
      %v720 = vlaneseq
      %v721 = vshrl.u32 %v720, 7
      %v722 = vsub.s32 0, %v721
      %v723 = vrot.slane %v719, %v722
      %v724 = vmul.f32 %v701, %v723
      %v725 = vmul.f32 %v702, %v723
      %v726 = vmul.f32 %v703, %v723
      %v727 = vmul.f32 %v704, %v723
      %v728 = vmul.f32 %v705, %v723
      %v729 = vmul.f32 %v706, %v723
      %v730 = vmul.f32 %v707, %v723
      %v731 = vmul.f32 %v708, %v723
      %v732 = vmul.f32 %v709, %v723
      %v733 = vmul.f32 %v710, %v723
      %v734 = vmul.f32 %v711, %v723
      %v735 = vmul.f32 %v712, %v723
      %v736 = vmul.f32 %v713, %v723
      %v737 = vmul.f32 %v714, %v723
      %v738 = vmul.f32 %v715, %v723
      %v739 = vmul.f32 %v716, %v723
      %v740 = vadd.f32 %v172, %v724
      %v741 = vadd.f32 %v173, %v725
      %v742 = vadd.f32 %v174, %v726
      %v743 = vadd.f32 %v175, %v727
      %v744 = vadd.f32 %v176, %v728
      %v745 = vadd.f32 %v177, %v729
      %v746 = vadd.f32 %v178, %v730
      %v747 = vadd.f32 %v179, %v731
      %v748 = vadd.f32 %v180, %v732
      %v749 = vadd.f32 %v181, %v733
      %v750 = vadd.f32 %v182, %v734
      %v751 = vadd.f32 %v183, %v735
      %v752 = vadd.f32 %v184, %v736
      %v753 = vadd.f32 %v185, %v737
      %v754 = vadd.f32 %v186, %v738
      %v755 = vadd.f32 %v187, %v739
    $region26: #{tpu_custom_call.1} parent=1 // loop_footer
      %s171 = sadd.s32 1, %s167
    $region27: #{tpu_custom_call.1} parent=1 // loop_footer_branch
      %166 = sbr.rel target = $region23
    $region28: #{tpu_custom_call.1} parent=1 // loop_exit
      _
    %v756 = vld [vmem:[#allocation6 + $0x28] sm:$0x7]
    %757 = vxpose.xlu0.b32.start [1/16] %v172, 128
    %758 = vxpose.xlu0.b32.cont [2/16] %v173, 128
    %759 = vxpose.xlu0.b32.cont [3/16] %v174, 128
    %760 = vxpose.xlu0.b32.cont [4/16] %v175, 128
    %761 = vxpose.xlu0.b32.cont [5/16] %v176, 128
    %762 = vxpose.xlu0.b32.cont [6/16] %v177, 128
    %763 = vxpose.xlu0.b32.cont [7/16] %v178, 128
    %764 = vxpose.xlu0.b32.cont [8/16] %v179, 128
    %765 = vxpose.xlu0.b32.cont [9/16] %v180, 128
    %766 = vxpose.xlu0.b32.cont [10/16] %v181, 128
    %767 = vxpose.xlu0.b32.cont [11/16] %v182, 128
    %768 = vxpose.xlu0.b32.cont [12/16] %v183, 128
    %769 = vxpose.xlu0.b32.cont [13/16] %v184, 128
    %770 = vxpose.xlu0.b32.cont [14/16] %v185, 128
    %771 = vxpose.xlu0.b32.cont [15/16] %v186, 128
    %772 = vxpose.xlu0.b32.end [16/16] %v187, 128
    %v773 = vpop.trf.xlu0
    %v774 = vpop.trf.xlu0
    %v775 = vpop.trf.xlu0
    %v776 = vpop.trf.xlu0
    %v777 = vpop.trf.xlu0
    %v778 = vpop.trf.xlu0
    %v779 = vpop.trf.xlu0
    %v780 = vpop.trf.xlu0
    %v781 = vpop.trf.xlu0
    %v782 = vpop.trf.xlu0
    %v783 = vpop.trf.xlu0
    %v784 = vpop.trf.xlu0
    %v785 = vpop.trf.xlu0
    %v786 = vpop.trf.xlu0
    %v787 = vpop.trf.xlu0
    %v788 = vpop.trf.xlu0
    %790 = vset.pattern.permute.xlu0 0
    %791 = vperm.xlu0 %790, %v756
    %v792 = vpop.permute.xlu0 %791
    %v794 = vadd.f32 %v773, %v792
    %v795 = vld [vmem:[#allocation6 + $0x30] sm:$0x7]
    %v796 = vld [vmem:[#allocation6 + $0x38] sm:$0x7]
    %v797 = vadd.f32 %v46, %v794
    %v798 = vsel %vm90, %v797, 0.0
    %v799 = vrot.slane %v798, 4
    %v800 = vadd.f32 %v798, %v799
    %v801 = vrot.slane %v800, 2
    %v802 = vadd.f32 %v800, %v801
    %v803 = vrot.slane %v802, 1
    %v804 = vadd.f32 %v802, %v803
    %v805 = vrcp.pop 3.0
    %v806 = vmul.f32 %v804, %v805
    %v807 = vsub.f32 %v797, %v806
    %v808 = vmul.f32 %v807, %v807
    %v809 = vsel %vm90, %v808, 0.0
    %v810 = vrot.slane %v809, 4
    %v811 = vadd.f32 %v809, %v810
    %v812 = vrot.slane %v811, 2
    %v813 = vadd.f32 %v811, %v812
    %v814 = vrot.slane %v813, 1
    %v815 = vadd.f32 %v813, %v814
    %v816 = vmul.f32 %v815, %v805
    %v817 = vadd.f32 %v816, 1e-05
    %v818 = vrsqrt.pop %v817
    %v819 = vmul.f32 %v807, %v818
    %821 = vset.pattern.permute.xlu0 0
    %822 = vperm.xlu0 %821, %v795
    %v823 = vpop.permute.xlu0 %822
    %v825 = vmul.f32 %v819, %v823
    %827 = vset.pattern.permute.xlu0 0
    %828 = vperm.xlu0 %827, %v796
    %v829 = vpop.permute.xlu0 %828
    %v831 = vadd.f32 %v825, %v829
    %v832 = vld [vmem:[#allocation6 + $0x50] sm:$0xff]
    %v833 = vld [vmem:[#allocation6 + $0x58] sm:$0xff]
    %v834 = vld [vmem:[#allocation6 + $0x60] sm:$0xff]
    %v835 = vld [vmem:[#allocation6 + $0x68] sm:$0xff]
    %v836 = vld [vmem:[#allocation6 + $0x70] sm:$0xff]
    %v837 = vld [vmem:[#allocation6 + $0x78] sm:$0xff]
    %v838 = vld [vmem:[#allocation6 + $0x80] sm:$0xff]
    %v839 = vld [vmem:[#allocation6 + $0x88] sm:$0xff]
    %v840 = vld [vmem:[#allocation6 + $0x90] sm:$0xff]
    %v841 = vld [vmem:[#allocation6 + $0x98] sm:$0xff]
    %v842 = vld [vmem:[#allocation6 + $0xa0] sm:$0xff]
    %v843 = vld [vmem:[#allocation6 + $0xa8] sm:$0xff]
    %v844 = vld [vmem:[#allocation6 + $0xb0] sm:$0xff]
    %v845 = vld [vmem:[#allocation6 + $0xb8] sm:$0xff]
    %v846 = vld [vmem:[#allocation6 + $0xc0] sm:$0xff]
    %v847 = vld [vmem:[#allocation6 + $0xc8] sm:$0xff]
    %v848 = vld [vmem:[#allocation6 + $0xd0] sm:$0x7]
    %v849 = vld [vmem:[#allocation6 + $0xd8] sm:$0x7]
    %851 = vset.pattern.permute.xlu0 0
    %852 = vperm.xlu0 %851, %v840
    %v853 = vpop.permute.xlu0 %852
    %856 = vset.pattern.permute.xlu0 0
    %857 = vperm.xlu0 %856, %v841
    %v858 = vpop.permute.xlu0 %857
    %861 = vset.pattern.permute.xlu0 0
    %862 = vperm.xlu0 %861, %v842
    %v863 = vpop.permute.xlu0 %862
    %866 = vset.pattern.permute.xlu0 0
    %867 = vperm.xlu0 %866, %v843
    %v868 = vpop.permute.xlu0 %867
    %871 = vset.pattern.permute.xlu0 0
    %872 = vperm.xlu0 %871, %v844
    %v873 = vpop.permute.xlu0 %872
    %876 = vset.pattern.permute.xlu0 0
    %877 = vperm.xlu0 %876, %v845
    %v878 = vpop.permute.xlu0 %877
    %881 = vset.pattern.permute.xlu0 0
    %882 = vperm.xlu0 %881, %v846
    %v883 = vpop.permute.xlu0 %882
    %886 = vset.pattern.permute.xlu0 0
    %887 = vperm.xlu0 %886, %v847
    %v888 = vpop.permute.xlu0 %887
    %v891 = vsel %vm86, %v832, 0
    %v894 = vsel %vm86, %v833, 0
    %v897 = vsel %vm86, %v834, 0
    %v900 = vsel %vm86, %v835, 0
    %v903 = vsel %vm86, %v836, 0
    %v906 = vsel %vm86, %v837, 0
    %v909 = vsel %vm86, %v838, 0
    %v912 = vsel %vm86, %v839, 0
    %v915 = vsel %vm90, %v831, 0
    %917 = vmatprep.subr.mxu0 0.0
    %918 = vmatpush1.msra.mxu0 %v915
    %919 = vmatprep.subr.mxu0 0.0
    %920 = vmatpush1.msra.mxu0 0.0
    %921 = vmatprep.subr.mxu0 0.0
    %922 = vmatpush1.msra.mxu0 0.0
    %923 = vmatprep.subr.mxu0 0.0
    %924 = vmatpush1.msra.mxu0 0.0
    %925 = vmatprep.subr.mxu0 0.0
    %926 = vmatpush1.msra.mxu0 0.0
    %927 = vmatprep.subr.mxu0 0.0
    %928 = vmatpush1.msra.mxu0 0.0
    %929 = vmatprep.subr.mxu0 0.0
    %930 = vmatpush1.msra.mxu0 0.0
    %931 = vmatprep.subr.mxu0 0.0
    %932 = vmatpush1.msra.mxu0 0.0
    %933 = vmatprep.subr.mxu0 0.0
    %934 = vmatpush1.msra.mxu0 0.0
    %935 = vmatprep.subr.mxu0 0.0
    %936 = vmatpush1.msra.mxu0 0.0
    %937 = vmatprep.subr.mxu0 0.0
    %938 = vmatpush1.msra.mxu0 0.0
    %939 = vmatprep.subr.mxu0 0.0
    %940 = vmatpush1.msra.mxu0 0.0
    %941 = vmatprep.subr.mxu0 0.0
    %942 = vmatpush1.msra.mxu0 0.0
    %943 = vmatprep.subr.mxu0 0.0
    %944 = vmatpush1.msra.mxu0 0.0
    %945 = vmatprep.subr.mxu0 0.0
    %946 = vmatpush1.msra.mxu0 0.0
    %947 = vmatprep.subr.mxu0 0.0
    %948 = vmatpush1.msra.mxu0 0.0
    %949 = vmatprep.subr.mxu0 0.0
    %950 = vmatpush1.msra.mxu0 0.0
    %951 = vmatprep.subr.mxu0 0.0
    %952 = vmatpush1.msra.mxu0 0.0
    %953 = vmatprep.subr.mxu0 0.0
    %954 = vmatpush1.msra.mxu0 0.0
    %955 = vmatprep.subr.mxu0 0.0
    %956 = vmatpush1.msra.mxu0 0.0
    %957 = vmatprep.subr.mxu0 0.0
    %958 = vmatpush1.msra.mxu0 0.0
    %959 = vmatprep.subr.mxu0 0.0
    %960 = vmatpush1.msra.mxu0 0.0
    %961 = vmatprep.subr.mxu0 0.0
    %962 = vmatpush1.msra.mxu0 0.0
    %963 = vmatprep.subr.mxu0 0.0
    %964 = vmatpush1.msra.mxu0 0.0
    %965 = vmatprep.subr.mxu0 0.0
    %966 = vmatpush1.msra.mxu0 0.0
    %967 = vmatprep.subr.mxu0 0.0
    %968 = vmatpush1.msra.mxu0 0.0
    %969 = vmatprep.subr.mxu0 0.0
    %970 = vmatpush1.msra.mxu0 0.0
    %971 = vmatprep.subr.mxu0 0.0
    %972 = vmatpush1.msra.mxu0 0.0
    %973 = vmatprep.subr.mxu0 0.0
    %974 = vmatpush1.msra.mxu0 0.0
    %975 = vmatprep.subr.mxu0 0.0
    %976 = vmatpush1.msra.mxu0 0.0
    %977 = vmatprep.subr.mxu0 0.0
    %978 = vmatpush1.msra.mxu0 0.0
    %979 = vmatprep.subr.mxu0 0.0
    %980 = vmatpush1.msra.mxu0 0.0
    %981 = vmatprep.mubr.f32.mxu0 0.0
    %982 = vmatmul.mubr.f32.gmra.mrb[0].mxu0 %v891
    %v983 = vpop.f32.mrb[0].mxu0
    %v984 = vadd.f32 %v853, %v983
    %v985 = vpop.f32.mrb[0].mxu0
    %986 = vmatprep.mubr.f32.mxu0 0.0
    %987 = vmatmul.mubr.f32.gmra.mrb[0].mxu0 %v894
    %v988 = vpop.f32.mrb[0].mxu0
    %v989 = vadd.f32 %v858, %v988
    %v990 = vpop.f32.mrb[0].mxu0
    %991 = vmatprep.mubr.f32.mxu0 0.0
    %992 = vmatmul.mubr.f32.gmra.mrb[0].mxu0 %v897
    %v993 = vpop.f32.mrb[0].mxu0
    %v994 = vadd.f32 %v863, %v993
    %v995 = vpop.f32.mrb[0].mxu0
    %996 = vmatprep.mubr.f32.mxu0 0.0
    %997 = vmatmul.mubr.f32.gmra.mrb[0].mxu0 %v900
    %v998 = vpop.f32.mrb[0].mxu0
    %v999 = vadd.f32 %v868, %v998
    %v1000 = vpop.f32.mrb[0].mxu0
    %1001 = vmatprep.mubr.f32.mxu0 0.0
    %1002 = vmatmul.mubr.f32.gmra.mrb[0].mxu0 %v903
    %v1003 = vpop.f32.mrb[0].mxu0
    %v1004 = vadd.f32 %v873, %v1003
    %v1005 = vpop.f32.mrb[0].mxu0
    %1006 = vmatprep.mubr.f32.mxu0 0.0
    %1007 = vmatmul.mubr.f32.gmra.mrb[0].mxu0 %v906
    %v1008 = vpop.f32.mrb[0].mxu0
    %v1009 = vadd.f32 %v878, %v1008
    %v1010 = vpop.f32.mrb[0].mxu0
    %1011 = vmatprep.mubr.f32.mxu0 0.0
    %1012 = vmatmul.mubr.f32.gmra.mrb[0].mxu0 %v909
    %v1013 = vpop.f32.mrb[0].mxu0
    %v1014 = vadd.f32 %v883, %v1013
    %v1015 = vpop.f32.mrb[0].mxu0
    %1016 = vmatprep.mubr.f32.mxu0 0.0
    %1017 = vmatmul.mubr.f32.gmra.mrb[0].mxu0 %v912
    %v1018 = vpop.f32.mrb[0].mxu0
    %v1019 = vadd.f32 %v888, %v1018
    %v1020 = vpop.f32.mrb[0].mxu0
    %1021 = vdwg.mxu0
    %v1022 = vmax.f32 %v984, 0.0
    %v1023 = vmax.f32 %v989, 0.0
    %v1024 = vmax.f32 %v994, 0.0
    %v1025 = vmax.f32 %v999, 0.0
    %v1026 = vmax.f32 %v1004, 0.0
    %v1027 = vmax.f32 %v1009, 0.0
    %v1028 = vmax.f32 %v1014, 0.0
    %v1029 = vmax.f32 %v1019, 0.0
    %1031 = vset.pattern.permute.xlu0 0
    %1032 = vperm.xlu0 %1031, %v849
    %v1033 = vpop.permute.xlu0 %1032
    %vm1035 = vcmask 523264
    %v1037 = vsel %vm1035, %v848, 0
    %1039 = vmatprep.subr.mxu0 0.0
    %1040 = vmatpush1.msra.mxu0 %v1022
    %1041 = vmatprep.subr.mxu0 0.0
    %1042 = vmatpush1.msra.mxu0 %v1023
    %1043 = vmatprep.subr.mxu0 0.0
    %1044 = vmatpush1.msra.mxu0 %v1024
    %1045 = vmatprep.subr.mxu0 0.0
    %1046 = vmatpush1.msra.mxu0 %v1025
    %1047 = vmatprep.subr.mxu0 0.0
    %1048 = vmatpush1.msra.mxu0 %v1026
    %1049 = vmatprep.subr.mxu0 0.0
    %1050 = vmatpush1.msra.mxu0 %v1027
    %1051 = vmatprep.subr.mxu0 0.0
    %1052 = vmatpush1.msra.mxu0 %v1028
    %1053 = vmatprep.subr.mxu0 0.0
    %1054 = vmatpush1.msra.mxu0 %v1029
    %1055 = vmatprep.subr.mxu0 0.0
    %1056 = vmatpush1.msra.mxu0 0.0
    %1057 = vmatprep.subr.mxu0 0.0
    %1058 = vmatpush1.msra.mxu0 0.0
    %1059 = vmatprep.subr.mxu0 0.0
    %1060 = vmatpush1.msra.mxu0 0.0
    %1061 = vmatprep.subr.mxu0 0.0
    %1062 = vmatpush1.msra.mxu0 0.0
    %1063 = vmatprep.subr.mxu0 0.0
    %1064 = vmatpush1.msra.mxu0 0.0
    %1065 = vmatprep.subr.mxu0 0.0
    %1066 = vmatpush1.msra.mxu0 0.0
    %1067 = vmatprep.subr.mxu0 0.0
    %1068 = vmatpush1.msra.mxu0 0.0
    %1069 = vmatprep.subr.mxu0 0.0
    %1070 = vmatpush1.msra.mxu0 0.0
    %1071 = vmatprep.subr.mxu0 0.0
    %1072 = vmatpush1.msra.mxu0 0.0
    %1073 = vmatprep.subr.mxu0 0.0
    %1074 = vmatpush1.msra.mxu0 0.0
    %1075 = vmatprep.subr.mxu0 0.0
    %1076 = vmatpush1.msra.mxu0 0.0
    %1077 = vmatprep.subr.mxu0 0.0
    %1078 = vmatpush1.msra.mxu0 0.0
    %1079 = vmatprep.subr.mxu0 0.0
    %1080 = vmatpush1.msra.mxu0 0.0
    %1081 = vmatprep.subr.mxu0 0.0
    %1082 = vmatpush1.msra.mxu0 0.0
    %1083 = vmatprep.subr.mxu0 0.0
    %1084 = vmatpush1.msra.mxu0 0.0
    %1085 = vmatprep.subr.mxu0 0.0
    %1086 = vmatpush1.msra.mxu0 0.0
    %1087 = vmatprep.subr.mxu0 0.0
    %1088 = vmatpush1.msra.mxu0 0.0
    %1089 = vmatprep.subr.mxu0 0.0
    %1090 = vmatpush1.msra.mxu0 0.0
    %1091 = vmatprep.subr.mxu0 0.0
    %1092 = vmatpush1.msra.mxu0 0.0
    %1093 = vmatprep.subr.mxu0 0.0
    %1094 = vmatpush1.msra.mxu0 0.0
    %1095 = vmatprep.subr.mxu0 0.0
    %1096 = vmatpush1.msra.mxu0 0.0
    %1097 = vmatprep.subr.mxu0 0.0
    %1098 = vmatpush1.msra.mxu0 0.0
    %1099 = vmatprep.subr.mxu0 0.0
    %1100 = vmatpush1.msra.mxu0 0.0
    %1101 = vmatprep.subr.mxu0 0.0
    %1102 = vmatpush1.msra.mxu0 0.0
    %1103 = vmatprep.mubr.f32.mxu0 0.0
    %1104 = vmatmul.mubr.f32.gmra.mrb[0].mxu0 %v1037
    %v1105 = vpop.f32.mrb[0].mxu0
    %v1106 = vadd.f32 %v1033, %v1105
    %v1107 = vpop.f32.mrb[0].mxu0
    %1108 = vdwg.mxu0
    %v1109 = vld [vmem:[#allocation6 + $0x40] sm:$0x7]
    %v1110 = vld [vmem:[#allocation6 + $0x48] sm:$0x7]
    %v1111 = vadd.f32 %v831, %v1106
    %v1112 = vsel %vm90, %v1111, 0.0
    %v1113 = vrot.slane %v1112, 4
    %v1114 = vadd.f32 %v1112, %v1113
    %v1115 = vrot.slane %v1114, 2
    %v1116 = vadd.f32 %v1114, %v1115
    %v1117 = vrot.slane %v1116, 1
    %v1118 = vadd.f32 %v1116, %v1117
    %v1119 = vmul.f32 %v1118, %v805
    %v1120 = vsub.f32 %v1111, %v1119
    %v1121 = vmul.f32 %v1120, %v1120
    %v1122 = vsel %vm90, %v1121, 0.0
    %v1123 = vrot.slane %v1122, 4
    %v1124 = vadd.f32 %v1122, %v1123
    %v1125 = vrot.slane %v1124, 2
    %v1126 = vadd.f32 %v1124, %v1125
    %v1127 = vrot.slane %v1126, 1
    %v1128 = vadd.f32 %v1126, %v1127
    %v1129 = vmul.f32 %v1128, %v805
    %v1130 = vadd.f32 %v1129, 1e-05
    %v1131 = vrsqrt.pop %v1130
    %v1132 = vmul.f32 %v1120, %v1131
    %1134 = vset.pattern.permute.xlu0 0
    %1135 = vperm.xlu0 %1134, %v1109
    %v1136 = vpop.permute.xlu0 %1135
    %v1138 = vmul.f32 %v1132, %v1136
    %1140 = vset.pattern.permute.xlu0 0
    %1141 = vperm.xlu0 %1140, %v1110
    %v1142 = vpop.permute.xlu0 %1141
    %v1144 = vadd.f32 %v1138, %v1142
    %1145 = vst [vmem:[#allocation8] sm:$0x7] %v1144
    // Predicated region
    $region29: #{tpu_custom_call.1} parent=1 // pred_check
      _
    $region30: #{tpu_custom_call.1} parent=1 // pred_check_branch
      %1147 = sbr.rel (0) target = $region32
    $region31: #{tpu_custom_call.1} parent=1 // pred_region
      %s1149 = ssub.s32 64, 64
      %1150 = vsyncadd [#allocation5], %s1149
      %s1152 = sshll.u32 [#allocation8], 4
      %s1153 = int_to_ptr.vmem [resolvable:$true] %s1152
      %1155 = dma.vmem_to_hbm [thread:$0]  %s1153, 64, %s3, [#allocation5]
    $region32: #{tpu_custom_call.1} parent=1 // pred_fallthru
      _
    // Predicated region
    $region33: #{tpu_custom_call.1} parent=1 // pred_check
      _
    $region34: #{tpu_custom_call.1} parent=1 // pred_check_branch
      %1157 = sbr.rel (0) target = $region36
    $region35: #{tpu_custom_call.1} parent=1 // pred_region
      %1158 = dma.done [#allocation5], 64
    $region36: #{tpu_custom_call.1} parent=1 // pred_fallthru
      _
    %1159 = vsyncpa [#allocation4], 1
    %1160 = vsyncpa [#allocation7], 1
    %1161 = vsyncpa [#allocation5], 1

</llo_original>
